<compile_context>
chip_gen: v5e
topology: v5e:2x2
jax: 0.10.0
libtpu: 0.0.40
codegen_flags: <defaults>
</compile_context>

<pallas_src>
import functools

import jax
import jax.numpy as jnp
from jax.experimental import pallas as pl
from jax.experimental.pallas import tpu as pltpu

LANE = 128  # TPU vreg lane width — feature dims of the weights are padded to this.


def _round_up(n, m):
    return ((n + m - 1) // m) * m


def _mlp_kernel(x_ref, w1_ref, b1_ref, w2_ref, b2_ref, w3_ref, b3_ref,
                o_ref, xpad_ref, *, in_size, out_size):
    """relu(x@W1+b1) -> relu(.@W2+b2) -> .@W3+b3 on one batch tile.

    x_ref   : [TB, in_size]   logical-width input tile (streamed from HBM)
    w*/b*   : 128-lane zero-padded weights/biases, VMEM-resident across the grid
    o_ref   : [TB, out_size]  logical-width output tile
    xpad_ref: [TB, K1]        VMEM staging buffer for the lane-padded input
    """
    K1 = xpad_ref.shape[-1]

    # Lane-pad x inside the kernel instead of in HBM.  Re-zero the padding
    # lanes every step (cheap vst-slot work, overlapped with MXU/VPU) so the
    # result is correct even when the parallel batch axis is split across
    # TensorCores and this core never executes grid step 0.
    if in_size != K1:  # static (trace-time) condition
        xpad_ref[...] = jnp.zeros_like(xpad_ref)
    xpad_ref[:, :in_size] = x_ref[...]
    x = xpad_ref[...]

    h1 = jnp.dot(x, w1_ref[...], preferred_element_type=jnp.float32) + b1_ref[...]
    h1 = jnp.maximum(h1, 0.0)
    h2 = jnp.dot(h1, w2_ref[...], preferred_element_type=jnp.float32) + b2_ref[...]
    h2 = jnp.maximum(h2, 0.0)
    out = jnp.dot(h2, w3_ref[...], preferred_element_type=jnp.float32) + b3_ref[...]

    # Logical-width writeback: masked vst, but ~32x less HBM write traffic than
    # a 128-wide padded output and no wrapper slice pass afterwards.
    o_ref[...] = out[:, :out_size].astype(o_ref.dtype)


def decision_model_forward(x, padded_params, out_size, tb=4096):
    """Run the fused MLP kernel.

    x:             [B, input_size] float32 (logical width — NOT padded in HBM)
    padded_params: dict from pad_params() — weight feature dims padded to 128.
    out_size:      logical number of outputs (columns written back).
    tb:            max batch-tile rows per grid step.
    """
    B, in_size = x.shape
    p = padded_params
    K1, H1 = p["w1"].shape      # padded input width / hidden1 width (128, 128)
    H2 = p["w2"].shape[1]       # padded hidden2 width (128)
    F3 = p["w3"].shape[1]       # padded output width (128)
    assert out_size <= F3 and in_size <= K1

    x = x.astype(jnp.float32)

    # Pad batch only to a sublane multiple (<= 7 dead rows).
    Bp = _round_up(B, 8)
    if Bp != B:
        x = jnp.pad(x, ((0, Bp - B), (0, 0)))

    # Batch tile: as large as possible (amortize per-step overhead) but at most
    # ceil(Bp/2) so there are >= 2 tiles whenever Bp >= 16 (both v7x TCs busy).
    TB = max(8, min(tb, _round_up(pl.cdiv(Bp, 2), 8)))
    grid = (pl.cdiv(Bp, TB),)  # ragged last tile handled by edge-block masking

    vmem = pltpu.MemorySpace.VMEM

    def resident(shape):
        # Same block at every grid step -> stays VMEM resident across the grid.
        return pl.BlockSpec(shape, lambda i: (0, 0), memory_space=vmem)

    flops = 2 * Bp * (K1 * H1 + H1 * H2 + H2 * F3)
    bytes_accessed = 4 * (
        Bp * in_size + Bp * out_size                 # streamed x / out tiles
        + K1 * H1 + H1 * H2 + H2 * F3                # resident weights (read once)
        + H1 + H2 + F3)                              # biases

    kernel = functools.partial(_mlp_kernel, in_size=in_size, out_size=out_size)

    out = pl.pallas_call(
        kernel,
        out_shape=jax.ShapeDtypeStruct((Bp, out_size), jnp.float32),
        grid=grid,
        in_specs=[
            # Logical-width x tile: last dim equals the full array dim -> legal
            # block, single contiguous DMA per tile.
            pl.BlockSpec((TB, in_size), lambda i: (i, 0), memory_space=vmem),
            resident(p["w1"].shape),
            resident(p["b1"].shape),
            resident(p["w2"].shape),
            resident(p["b2"].shape),
            resident(p["w3"].shape),
            resident(p["b3"].shape),
        ],
        out_specs=pl.BlockSpec((TB, out_size), lambda i: (i, 0), memory_space=vmem),
        scratch_shapes=[pltpu.VMEM((TB, K1), jnp.float32)],
        compiler_params=pltpu.CompilerParams(
            dimension_semantics=("parallel",),     # shard batch tiles across TCs (v7x)
            vmem_limit_bytes=64 * 1024 * 1024),    # headroom for large TB (v5e default 16 MiB)
        cost_estimate=pl.CostEstimate(
            flops=flops, transcendentals=0, bytes_accessed=bytes_accessed),
    )(x, p["w1"], p["b1"], p["w2"], p["b2"], p["w3"], p["b3"])

    # Only up to 7 batch-padding rows may need trimming; columns are already
    # at the logical width.
    return out[:B] if Bp != B else out


def init_params(key, input_size, output_size):
    """Logical params mirroring nn.Linear shapes (stored transposed: [in, out])."""
    k = jax.random.split(key, 6)

    def linear(kw, kb, fan_in, fan_out):
        bound = 1.0 / jnp.sqrt(jnp.float32(fan_in))
        w = jax.random.uniform(kw, (fan_in, fan_out), jnp.float32, -bound, bound)
        b = jax.random.uniform(kb, (1, fan_out), jnp.float32, -bound, bound)
        return w, b

    w1, b1 = linear(k[0], k[1], input_size, 64)
    w2, b2 = linear(k[2], k[3], 64, 32)
    w3, b3 = linear(k[4], k[5], 32, output_size)
    return {"w1": w1, "b1": b1, "w2": w2, "b2": b2, "w3": w3, "b3": b3}


def pad_params(params, dtype=jnp.float32):
    """Zero-pad every weight feature dim to the 128-lane boundary (once, at init).

    Zero padding + ReLU(0)=0 keeps the (sliced) result identical to the
    unpadded computation.  dtype=jnp.bfloat16 halves weight/VMEM traffic and is
    valid on all generations including v5e (the v5e MXU supports bf16; only its
    VPU lacks it, and the VPU work here stays f32) — if used, loosen the
    comparison tolerance in the test (~1e-2 relative).
    """
    def pad(a):
        r, c = a.shape
        rp = r if r == 1 else _round_up(r, LANE)
        cp = _round_up(c, LANE)
        return jnp.pad(a, ((0, rp - r), (0, cp - c))).astype(dtype)

    return {k: pad(v) for k, v in params.items()}


def _reference_forward(x, p):
    h1 = jnp.maximum(x @ p["w1"] + p["b1"], 0.0)
    h2 = jnp.maximum(h1 @ p["w2"] + p["b2"], 0.0)
    return h2 @ p["w3"] + p["b3"]


if __name__ == "__main__":
    # Observation vector is [energy_demand, renewable_generation, battery_level,
    # grid_price] => input_size = 4; actions = 4 => output_size = 4. Batch of 8.
    # NOTE: at B=8 this is launch-overhead dominated; the Pallas path pays off
    # when many environment steps are batched per call.
    input_size, output_size, batch = 4, 4, 8

    key = jax.random.PRNGKey(0)
    k_params, k_x, k_x2 = jax.random.split(key, 3)
    params = init_params(k_params, input_size, output_size)
    padded = pad_params(params)  # pad once, ahead of time
    x = jax.random.normal(k_x, (batch, input_size), dtype=jnp.float32)

    fwd = jax.jit(functools.partial(decision_model_forward, out_size=output_size))
    out = jax.block_until_ready(fwd(x, padded))
    ref = _reference_forward(x, params)
    assert out.shape == (batch, output_size)
    assert jnp.allclose(out, ref, atol=1e-5, rtol=1e-5)

    # Exercise the multi-tile path with batch padding + a ragged last tile
    # (B=20 -> Bp=24, TB=16, grid=(2,), second tile partially out of bounds).
    x2 = jax.random.normal(k_x2, (20, input_size), dtype=jnp.float32)
    out2 = jax.block_until_ready(fwd(x2, padded))
    ref2 = _reference_forward(x2, params)
    assert out2.shape == (20, output_size)
    assert jnp.allclose(out2, ref2, atol=1e-5, rtol=1e-5)

    print("KERNEL_OK")
</pallas_src>

<mosaic_0001>
module attributes {stable_mosaic.version = 11 : i64} {
  func.func @_mlp_kernel(%arg0: i32, %arg1: memref<8x4xf32, #tpu.memory_space<vmem>>, %arg2: memref<128x128xf32, #tpu.memory_space<vmem>>, %arg3: memref<1x128xf32, #tpu.memory_space<vmem>>, %arg4: memref<128x128xf32, #tpu.memory_space<vmem>>, %arg5: memref<1x128xf32, #tpu.memory_space<vmem>>, %arg6: memref<128x128xf32, #tpu.memory_space<vmem>>, %arg7: memref<1x128xf32, #tpu.memory_space<vmem>>, %arg8: memref<8x4xf32, #tpu.memory_space<vmem>>, %arg9: memref<8x128xf32, #tpu.memory_space<vmem>>) attributes {dimension_semantics = [#tpu.dimension_semantics<parallel>], iteration_bounds = array<i64: 1>, scalar_prefetch = 0 : i64, scratch_operands = 1 : i64, tpu.core_type = #tpu.core_type<tc>, window_params = [{transform_indices = @transform_0, window_bounds = array<i64: 8, 4>}, {pipeline_mode = #tpu.pipeline_mode<synchronous>, transform_indices = @transform_1, window_bounds = array<i64: 128, 128>}, {pipeline_mode = #tpu.pipeline_mode<synchronous>, transform_indices = @transform_2, window_bounds = array<i64: 1, 128>}, {pipeline_mode = #tpu.pipeline_mode<synchronous>, transform_indices = @transform_3, window_bounds = array<i64: 128, 128>}, {pipeline_mode = #tpu.pipeline_mode<synchronous>, transform_indices = @transform_4, window_bounds = array<i64: 1, 128>}, {pipeline_mode = #tpu.pipeline_mode<synchronous>, transform_indices = @transform_5, window_bounds = array<i64: 128, 128>}, {pipeline_mode = #tpu.pipeline_mode<synchronous>, transform_indices = @transform_6, window_bounds = array<i64: 1, 128>}, {transform_indices = @transform_7, window_bounds = array<i64: 8, 4>}]} {
    %cst = arith.constant 0.000000e+00 : f32
    %0 = vector.broadcast %cst : f32 to vector<8x128xf32>
    %c0 = arith.constant 0 : index
    %c0_0 = arith.constant 0 : index
    %1 = vector.load %arg9[%c0, %c0_0] : memref<8x128xf32, #tpu.memory_space<vmem>>, vector<8x128xf32>
    tpu.vector_store %arg9[%c0, %c0_0], %0 {strides = array<i32>} : memref<8x128xf32, #tpu.memory_space<vmem>>, vector<8x128xf32>,
    %c0_1 = arith.constant 0 : index
    %c0_2 = arith.constant 0 : index
    %2 = vector.load %arg1[%c0_1, %c0_2] : memref<8x4xf32, #tpu.memory_space<vmem>>, vector<8x4xf32>
    %c0_3 = arith.constant 0 : index
    %c0_4 = arith.constant 0 : index
    %3 = vector.load %arg9[%c0_3, %c0_4] : memref<8x128xf32, #tpu.memory_space<vmem>>, vector<8x4xf32>
    tpu.vector_store %arg9[%c0_3, %c0_4], %2 {strides = array<i32>} : memref<8x128xf32, #tpu.memory_space<vmem>>, vector<8x4xf32>,
    %c0_5 = arith.constant 0 : index
    %c0_6 = arith.constant 0 : index
    %4 = vector.load %arg9[%c0_5, %c0_6] : memref<8x128xf32, #tpu.memory_space<vmem>>, vector<8x128xf32>
    %c0_7 = arith.constant 0 : index
    %c0_8 = arith.constant 0 : index
    %5 = vector.load %arg2[%c0_7, %c0_8] : memref<128x128xf32, #tpu.memory_space<vmem>>, vector<128x128xf32>
    %cst_9 = arith.constant dense<0.000000e+00> : vector<8x128xf32>
    %6 = tpu.matmul %4, %5, %cst_9 {dimension_numbers = #tpu.dot_dimension_numbers<[1], [0], [0], [1], [0, 0, 1, 1], [], []>} : vector<8x128xf32>, vector<128x128xf32>, vector<8x128xf32> -> vector<8x128xf32>
    %c0_10 = arith.constant 0 : index
    %c0_11 = arith.constant 0 : index
    %7 = vector.load %arg3[%c0_10, %c0_11] : memref<1x128xf32, #tpu.memory_space<vmem>>, vector<1x128xf32>
    %8 = vector.broadcast %7 : vector<1x128xf32> to vector<8x128xf32>
    %9 = arith.addf %6, %8 : vector<8x128xf32>
    %cst_12 = arith.constant 0.000000e+00 : f32
    %10 = vector.broadcast %cst_12 : f32 to vector<8x128xf32>
    %11 = arith.maximumf %9, %10 : vector<8x128xf32>
    %c0_13 = arith.constant 0 : index
    %c0_14 = arith.constant 0 : index
    %12 = vector.load %arg4[%c0_13, %c0_14] : memref<128x128xf32, #tpu.memory_space<vmem>>, vector<128x128xf32>
    %cst_15 = arith.constant dense<0.000000e+00> : vector<8x128xf32>
    %13 = tpu.matmul %11, %12, %cst_15 {dimension_numbers = #tpu.dot_dimension_numbers<[1], [0], [0], [1], [0, 0, 1, 1], [], []>} : vector<8x128xf32>, vector<128x128xf32>, vector<8x128xf32> -> vector<8x128xf32>
    %c0_16 = arith.constant 0 : index
    %c0_17 = arith.constant 0 : index
    %14 = vector.load %arg5[%c0_16, %c0_17] : memref<1x128xf32, #tpu.memory_space<vmem>>, vector<1x128xf32>
    %15 = vector.broadcast %14 : vector<1x128xf32> to vector<8x128xf32>
    %16 = arith.addf %13, %15 : vector<8x128xf32>
    %cst_18 = arith.constant 0.000000e+00 : f32
    %17 = vector.broadcast %cst_18 : f32 to vector<8x128xf32>
    %18 = arith.maximumf %16, %17 : vector<8x128xf32>
    %c0_19 = arith.constant 0 : index
    %c0_20 = arith.constant 0 : index
    %19 = vector.load %arg6[%c0_19, %c0_20] : memref<128x128xf32, #tpu.memory_space<vmem>>, vector<128x128xf32>
    %cst_21 = arith.constant dense<0.000000e+00> : vector<8x128xf32>
    %20 = tpu.matmul %18, %19, %cst_21 {dimension_numbers = #tpu.dot_dimension_numbers<[1], [0], [0], [1], [0, 0, 1, 1], [], []>} : vector<8x128xf32>, vector<128x128xf32>, vector<8x128xf32> -> vector<8x128xf32>
    %c0_22 = arith.constant 0 : index
    %c0_23 = arith.constant 0 : index
    %21 = vector.load %arg7[%c0_22, %c0_23] : memref<1x128xf32, #tpu.memory_space<vmem>>, vector<1x128xf32>
    %22 = vector.broadcast %21 : vector<1x128xf32> to vector<8x128xf32>
    %23 = arith.addf %20, %22 : vector<8x128xf32>
    %24 = vector.extract_strided_slice %23 {offsets = [0, 0], sizes = [8, 4], strides = [1, 1]} : vector<8x128xf32> to vector<8x4xf32>
    %c0_24 = arith.constant 0 : index
    %c0_25 = arith.constant 0 : index
    %25 = vector.load %arg8[%c0_24, %c0_25] : memref<8x4xf32, #tpu.memory_space<vmem>>, vector<8x4xf32>
    tpu.vector_store %arg8[%c0_24, %c0_25], %24 {strides = array<i32>} : memref<8x4xf32, #tpu.memory_space<vmem>>, vector<8x4xf32>,
    return
  }
  func.func @transform_0(%arg0: i32) -> (i32, i32) {
    %c0_i32 = arith.constant 0 : i32
    %c0_i32_0 = arith.constant 0 : i32
    return %arg0, %c0_i32 : i32, i32
  }
  func.func @transform_1(%arg0: i32) -> (i32, i32) {
    %c0_i32 = arith.constant 0 : i32
    %c0_i32_0 = arith.constant 0 : i32
    %c0_i32_1 = arith.constant 0 : i32
    return %c0_i32, %c0_i32_0 : i32, i32
  }
  func.func @transform_2(%arg0: i32) -> (i32, i32) {
    %c0_i32 = arith.constant 0 : i32
    %c0_i32_0 = arith.constant 0 : i32
    %c0_i32_1 = arith.constant 0 : i32
    return %c0_i32, %c0_i32_0 : i32, i32
  }
  func.func @transform_3(%arg0: i32) -> (i32, i32) {
    %c0_i32 = arith.constant 0 : i32
    %c0_i32_0 = arith.constant 0 : i32
    %c0_i32_1 = arith.constant 0 : i32
    return %c0_i32, %c0_i32_0 : i32, i32
  }
  func.func @transform_4(%arg0: i32) -> (i32, i32) {
    %c0_i32 = arith.constant 0 : i32
    %c0_i32_0 = arith.constant 0 : i32
    %c0_i32_1 = arith.constant 0 : i32
    return %c0_i32, %c0_i32_0 : i32, i32
  }
  func.func @transform_5(%arg0: i32) -> (i32, i32) {
    %c0_i32 = arith.constant 0 : i32
    %c0_i32_0 = arith.constant 0 : i32
    %c0_i32_1 = arith.constant 0 : i32
    return %c0_i32, %c0_i32_0 : i32, i32
  }
  func.func @transform_6(%arg0: i32) -> (i32, i32) {
    %c0_i32 = arith.constant 0 : i32
    %c0_i32_0 = arith.constant 0 : i32
    %c0_i32_1 = arith.constant 0 : i32
    return %c0_i32, %c0_i32_0 : i32, i32
  }
  func.func @transform_7(%arg0: i32) -> (i32, i32) {
    %c0_i32 = arith.constant 0 : i32
    %c0_i32_0 = arith.constant 0 : i32
    return %arg0, %c0_i32 : i32, i32
  }
}

</mosaic_0001>

<llo_original>
// kernel: decision_model_forward.1
$region0: #{decision_model_forward.1}
  #allocation0 [shape = 'u32[]', space=smem, size = 0x4, offset = 0x4, fixed_abs, tag = 'smem constant byte address 0x4 - core index']
  #allocation1 [shape = 'u32[72,128]{1,0:T(1,128)}', space=vmem, size = 0x9000, scoped, tag = 'internal scratch']
  #allocation2 [shape = 'f32[8,128]{1,0:T(8,128)}', space=vmem, size = 0x1000, scoped, tag = 'scratch operand']
  %s0 = inlined_call_operand.vmem [shape: f32[8,4], index: 0, kind: input, shape index: {}]
  %s1 = inlined_call_operand.hbm [shape: f32[128,128], index: 1, kind: input, shape index: {}]
  %s2 = inlined_call_operand.vmem [shape: f32[1,128], index: 2, kind: input, shape index: {}]
  %s3 = inlined_call_operand.hbm [shape: f32[128,128], index: 3, kind: input, shape index: {}]
  %s4 = inlined_call_operand.vmem [shape: f32[1,128], index: 4, kind: input, shape index: {}]
  %s5 = inlined_call_operand.hbm [shape: f32[128,128], index: 5, kind: input, shape index: {}]
  %s6 = inlined_call_operand.vmem [shape: f32[1,128], index: 6, kind: input, shape index: {}]
  %s7 = inlined_call_operand.vmem [shape: f32[8,4], index: 7, kind: output, shape index: {}]
  %s8 = sld [smem:[#allocation0]]
  $region50: #{decision_model_forward.1} parent=0
    _
  %s10 = ssub.s32 1, %s8
  %s11 = scalar_select 0, %s10, %s8
  $region1: #{decision_model_forward.1} parent=0
    #allocation3 [shape = 'u8[65536]{0}', space=vmem, size = 0x10000, scoped, tag = 'input window, operand 1, single buffered']
    #allocation4 [shape = 's32[1]{0}', space=sflag, size = 0x4, scoped, tag = 'scoped memory for decision_model_forward.1']
    #allocation5 [shape = 'u8[65536]{0}', space=vmem, size = 0x10000, scoped, tag = 'input window, operand 3, single buffered']
    #allocation6 [shape = 's32[1]{0}', space=sflag, size = 0x4, scoped, tag = 'scoped memory for decision_model_forward.1']
    #allocation7 [shape = 'u8[65536]{0}', space=vmem, size = 0x10000, scoped, tag = 'input window, operand 5, single buffered']
    %12 = vsyncpa [#allocation4], 0
    %13 = vsyncpa [#allocation6], 0
    // Predicated region
    $region2: #{decision_model_forward.1} parent=1 // pred_check
      _
    $region3: #{decision_model_forward.1} parent=1 // pred_check_branch
      %15 = sbr.rel (0) target = $region5
    $region4: #{decision_model_forward.1} parent=1 // pred_region
      _
    $region5: #{decision_model_forward.1} parent=1 // pred_fallthru
      _
    // Predicated region
    $region6: #{decision_model_forward.1} parent=1 // pred_check
      _
    $region7: #{decision_model_forward.1} parent=1 // pred_check_branch
      %17 = sbr.rel (0) target = $region9
    $region8: #{decision_model_forward.1} parent=1 // pred_region
      %19 = vsyncadd [#allocation4], 0
      %s20 = sshll.u32 %s1, 4
      %s21 = int_to_ptr.hbm [resolvable:$true] %s20
      %s22 = sshll.u32 [#allocation3], 4
      %s23 = int_to_ptr.vmem [resolvable:$true] %s22
      %28 = dma.hbm_to_vmem [thread:$0]  %s21, 2048, %s23, [#allocation4], 128, 128, 8
    $region9: #{decision_model_forward.1} parent=1 // pred_fallthru
      _
    // Predicated region
    $region10: #{decision_model_forward.1} parent=1 // pred_check
      _
    $region11: #{decision_model_forward.1} parent=1 // pred_check_branch
      %30 = sbr.rel (0) target = $region13
    $region12: #{decision_model_forward.1} parent=1 // pred_region
      _
    $region13: #{decision_model_forward.1} parent=1 // pred_fallthru
      _
    // Predicated region
    $region14: #{decision_model_forward.1} parent=1 // pred_check
      _
    $region15: #{decision_model_forward.1} parent=1 // pred_check_branch
      %32 = sbr.rel (0) target = $region17
    $region16: #{decision_model_forward.1} parent=1 // pred_region
      %34 = vsyncadd [#allocation6], 0
      %s35 = sshll.u32 %s3, 4
      %s36 = int_to_ptr.hbm [resolvable:$true] %s35
      %s37 = sshll.u32 [#allocation5], 4
      %s38 = int_to_ptr.vmem [resolvable:$true] %s37
      %43 = dma.hbm_to_vmem [thread:$0]  %s36, 2048, %s38, [#allocation6], 128, 128, 8
    $region17: #{decision_model_forward.1} parent=1 // pred_fallthru
      _
    // Predicated region
    $region18: #{decision_model_forward.1} parent=1 // pred_check
      _
    $region19: #{decision_model_forward.1} parent=1 // pred_check_branch
      %45 = sbr.rel (0) target = $region21
    $region20: #{decision_model_forward.1} parent=1 // pred_region
      _
    $region21: #{decision_model_forward.1} parent=1 // pred_fallthru
      _
    // Predicated region
    $region22: #{decision_model_forward.1} parent=1 // pred_check
      _
    $region23: #{decision_model_forward.1} parent=1 // pred_check_branch
      %47 = sbr.rel (0) target = $region25
    $region24: #{decision_model_forward.1} parent=1 // pred_region
      %49 = vsyncadd [#allocation6], 0
      %s50 = sshll.u32 %s5, 4
      %s51 = int_to_ptr.hbm [resolvable:$true] %s50
      %s52 = sshll.u32 [#allocation7], 4
      %s53 = int_to_ptr.vmem [resolvable:$true] %s52
      %58 = dma.hbm_to_vmem [thread:$0]  %s51, 2048, %s53, [#allocation6], 128, 128, 8
    $region25: #{decision_model_forward.1} parent=1 // pred_fallthru
      _
    // Predicated region
    $region26: #{decision_model_forward.1} parent=1 // pred_check
      _
    $region27: #{decision_model_forward.1} parent=1 // pred_check_branch
      %60 = sbr.rel (0) target = $region29
    $region28: #{decision_model_forward.1} parent=1 // pred_region
      _
    $region29: #{decision_model_forward.1} parent=1 // pred_fallthru
      _
    // Predicated region
    $region30: #{decision_model_forward.1} parent=1 // pred_check
      _
    $region31: #{decision_model_forward.1} parent=1 // pred_check_branch
      %62 = sbr.rel (0) target = $region33
    $region32: #{decision_model_forward.1} parent=1 // pred_region
      %64 = dma.done [#allocation4], 2048
    $region33: #{decision_model_forward.1} parent=1 // pred_fallthru
      _
    // Predicated region
    $region34: #{decision_model_forward.1} parent=1 // pred_check
      _
    $region35: #{decision_model_forward.1} parent=1 // pred_check_branch
      %66 = sbr.rel (0) target = $region37
    $region36: #{decision_model_forward.1} parent=1 // pred_region
      %68 = dma.done [#allocation6], 2048
    $region37: #{decision_model_forward.1} parent=1 // pred_fallthru
      _
    // Predicated region
    $region38: #{decision_model_forward.1} parent=1 // pred_check
      _
    $region39: #{decision_model_forward.1} parent=1 // pred_check_branch
      %70 = sbr.rel (0) target = $region41
    $region40: #{decision_model_forward.1} parent=1 // pred_region
      %72 = dma.done [#allocation6], 2048
    $region41: #{decision_model_forward.1} parent=1 // pred_fallthru
      _
    %73 = vst [vmem:[#allocation2] sm:$0xff] 0.0
    %v74 = vld [vmem:[%s0] sm:$0xff]
    %vm75 = vcmask 31744
    %76 = vst.msk [vmem:[#allocation2] sm:$0xff] %vm75, %v74
    %v77 = vld [vmem:[#allocation2] sm:$0xff]
    %v78 = vld [vmem:[#allocation3] sm:$0xff]
    %v79 = vld [vmem:[#allocation3 + $0x8] sm:$0xff]
    %v80 = vld [vmem:[#allocation3 + $0x10] sm:$0xff]
    %v81 = vld [vmem:[#allocation3 + $0x18] sm:$0xff]
    %v82 = vld [vmem:[#allocation3 + $0x20] sm:$0xff]
    %v83 = vld [vmem:[#allocation3 + $0x28] sm:$0xff]
    %v84 = vld [vmem:[#allocation3 + $0x30] sm:$0xff]
    %v85 = vld [vmem:[#allocation3 + $0x38] sm:$0xff]
    %v86 = vld [vmem:[#allocation3 + $0x40] sm:$0xff]
    %v87 = vld [vmem:[#allocation3 + $0x48] sm:$0xff]
    %v88 = vld [vmem:[#allocation3 + $0x50] sm:$0xff]
    %v89 = vld [vmem:[#allocation3 + $0x58] sm:$0xff]
    %v90 = vld [vmem:[#allocation3 + $0x60] sm:$0xff]
    %v91 = vld [vmem:[#allocation3 + $0x68] sm:$0xff]
    %v92 = vld [vmem:[#allocation3 + $0x70] sm:$0xff]
    %v93 = vld [vmem:[#allocation3 + $0x78] sm:$0xff]
    %v94 = vld [vmem:[%s2] sm:$0x1]
    %v96 = vperm.slane %v94, 0
    %98 = vmatpush.msra.mxu0 %v93
    %99 = vmatpush.msra.mxu0 %v92
    %100 = vmatpush.msra.mxu0 %v91
    %101 = vmatpush.msra.mxu0 %v90
    %102 = vmatpush.msra.mxu0 %v89
    %103 = vmatpush.msra.mxu0 %v88
    %104 = vmatpush.msra.mxu0 %v87
    %105 = vmatpush.msra.mxu0 %v86
    %106 = vmatpush.msra.mxu0 %v85
    %107 = vmatpush.msra.mxu0 %v84
    %108 = vmatpush.msra.mxu0 %v83
    %109 = vmatpush.msra.mxu0 %v82
    %110 = vmatpush.msra.mxu0 %v81
    %111 = vmatpush.msra.mxu0 %v80
    %112 = vmatpush.msra.mxu0 %v79
    %113 = vmatpush.msra.mxu0 %v78
    %114 = vmatmul.f32.gmra.mxu0 %v77
    %v115 = vpop.f32.mrf.mxu0
    %v116 = vadd.f32 %v96, %v115
    %117 = vdwg.mxu0
    %v118 = vmax.f32 %v116, 0.0
    %v119 = vld [vmem:[#allocation5] sm:$0xff]
    %v120 = vld [vmem:[#allocation5 + $0x8] sm:$0xff]
    %v121 = vld [vmem:[#allocation5 + $0x10] sm:$0xff]
    %v122 = vld [vmem:[#allocation5 + $0x18] sm:$0xff]
    %v123 = vld [vmem:[#allocation5 + $0x20] sm:$0xff]
    %v124 = vld [vmem:[#allocation5 + $0x28] sm:$0xff]
    %v125 = vld [vmem:[#allocation5 + $0x30] sm:$0xff]
    %v126 = vld [vmem:[#allocation5 + $0x38] sm:$0xff]
    %v127 = vld [vmem:[#allocation5 + $0x40] sm:$0xff]
    %v128 = vld [vmem:[#allocation5 + $0x48] sm:$0xff]
    %v129 = vld [vmem:[#allocation5 + $0x50] sm:$0xff]
    %v130 = vld [vmem:[#allocation5 + $0x58] sm:$0xff]
    %v131 = vld [vmem:[#allocation5 + $0x60] sm:$0xff]
    %v132 = vld [vmem:[#allocation5 + $0x68] sm:$0xff]
    %v133 = vld [vmem:[#allocation5 + $0x70] sm:$0xff]
    %v134 = vld [vmem:[#allocation5 + $0x78] sm:$0xff]
    %v135 = vld [vmem:[%s4] sm:$0x1]
    %v137 = vperm.slane %v135, 0
    %139 = vmatpush.msra.mxu0 %v134
    %140 = vmatpush.msra.mxu0 %v133
    %141 = vmatpush.msra.mxu0 %v132
    %142 = vmatpush.msra.mxu0 %v131
    %143 = vmatpush.msra.mxu0 %v130
    %144 = vmatpush.msra.mxu0 %v129
    %145 = vmatpush.msra.mxu0 %v128
    %146 = vmatpush.msra.mxu0 %v127
    %147 = vmatpush.msra.mxu0 %v126
    %148 = vmatpush.msra.mxu0 %v125
    %149 = vmatpush.msra.mxu0 %v124
    %150 = vmatpush.msra.mxu0 %v123
    %151 = vmatpush.msra.mxu0 %v122
    %152 = vmatpush.msra.mxu0 %v121
    %153 = vmatpush.msra.mxu0 %v120
    %154 = vmatpush.msra.mxu0 %v119
    %155 = vmatmul.f32.gmra.mxu0 %v118
    %v156 = vpop.f32.mrf.mxu0
    %v157 = vadd.f32 %v137, %v156
    %158 = vdwg.mxu0
    %v159 = vmax.f32 %v157, 0.0
    %v160 = vld [vmem:[#allocation7] sm:$0xff]
    %v161 = vld [vmem:[#allocation7 + $0x8] sm:$0xff]
    %v162 = vld [vmem:[#allocation7 + $0x10] sm:$0xff]
    %v163 = vld [vmem:[#allocation7 + $0x18] sm:$0xff]
    %v164 = vld [vmem:[#allocation7 + $0x20] sm:$0xff]
    %v165 = vld [vmem:[#allocation7 + $0x28] sm:$0xff]
    %v166 = vld [vmem:[#allocation7 + $0x30] sm:$0xff]
    %v167 = vld [vmem:[#allocation7 + $0x38] sm:$0xff]
    %v168 = vld [vmem:[#allocation7 + $0x40] sm:$0xff]
    %v169 = vld [vmem:[#allocation7 + $0x48] sm:$0xff]
    %v170 = vld [vmem:[#allocation7 + $0x50] sm:$0xff]
    %v171 = vld [vmem:[#allocation7 + $0x58] sm:$0xff]
    %v172 = vld [vmem:[#allocation7 + $0x60] sm:$0xff]
    %v173 = vld [vmem:[#allocation7 + $0x68] sm:$0xff]
    %v174 = vld [vmem:[#allocation7 + $0x70] sm:$0xff]
    %v175 = vld [vmem:[#allocation7 + $0x78] sm:$0xff]
    %v176 = vld [vmem:[%s6] sm:$0x1]
    %v178 = vperm.slane %v176, 0
    %180 = vmatpush.msra.mxu0 %v175
    %181 = vmatpush.msra.mxu0 %v174
    %182 = vmatpush.msra.mxu0 %v173
    %183 = vmatpush.msra.mxu0 %v172
    %184 = vmatpush.msra.mxu0 %v171
    %185 = vmatpush.msra.mxu0 %v170
    %186 = vmatpush.msra.mxu0 %v169
    %187 = vmatpush.msra.mxu0 %v168
    %188 = vmatpush.msra.mxu0 %v167
    %189 = vmatpush.msra.mxu0 %v166
    %190 = vmatpush.msra.mxu0 %v165
    %191 = vmatpush.msra.mxu0 %v164
    %192 = vmatpush.msra.mxu0 %v163
    %193 = vmatpush.msra.mxu0 %v162
    %194 = vmatpush.msra.mxu0 %v161
    %195 = vmatpush.msra.mxu0 %v160
    %196 = vmatmul.f32.gmra.mxu0 %v159
    %v197 = vpop.f32.mrf.mxu0
    %v198 = vadd.f32 %v178, %v197
    %199 = vdwg.mxu0
    %200 = vst.msk [vmem:[%s7] sm:$0xff] %vm75, %v198
    // Predicated region
    $region42: #{decision_model_forward.1} parent=1 // pred_check
      _
    $region43: #{decision_model_forward.1} parent=1 // pred_check_branch
      %202 = sbr.rel (0) target = $region45
    $region44: #{decision_model_forward.1} parent=1 // pred_region
      _
    $region45: #{decision_model_forward.1} parent=1 // pred_fallthru
      _
    // Predicated region
    $region46: #{decision_model_forward.1} parent=1 // pred_check
      _
    $region47: #{decision_model_forward.1} parent=1 // pred_check_branch
      %204 = sbr.rel (0) target = $region49
    $region48: #{decision_model_forward.1} parent=1 // pred_region
      _
    $region49: #{decision_model_forward.1} parent=1 // pred_fallthru
      _
    %205 = vsyncpa [#allocation4], 1
    %206 = vsyncpa [#allocation6], 1

</llo_original>
